<compile_context>
chip_gen: v5e
topology: v5e:2x2
jax: 0.10.0
libtpu: 0.0.40
codegen_flags: <defaults>
</compile_context>

<pallas_src>
import functools

import jax
import jax.numpy as jnp
from jax.experimental import pallas as pl
from jax.experimental.pallas import tpu as pltpu

_LANE = 128


def _elu(x):
    # ELU(alpha=1). exp(min(x,0)) - 1 keeps the false branch finite. (PyTorch
    # uses expm1; the difference is < 1 f32 ulp near 0, far below tolerance.)
    return jnp.where(x > 0.0, x, jnp.exp(jnp.minimum(x, 0.0)) - 1.0)


def _res_unit_kernel(*refs, dilation, ksize, tiled, ctx_w, stack_taps,
                     compute_dtype):
    """One (batch, time-tile) grid step, NCW layout (channels x time).

    tiled path refs:
      x_ref (1,C,TT) f32 | xh_ref (1,C,ctx_w) f32 | w_in (C,K*C) bf16 |
      b_in (C,1) f32 | w_out (C,C) | b_out (C,1) | w_sc (C,C) | b_sc (C,1) |
      o_ref (1,C,TT) f32
    untiled path: same without xh_ref (left context is zeros in-kernel).
    """
    if tiled:
        (x_ref, xh_ref, w_in_ref, b_in_ref, w_out_ref, b_out_ref,
         w_sc_ref, b_sc_ref, o_ref) = refs
    else:
        (x_ref, w_in_ref, b_in_ref, w_out_ref, b_out_ref,
         w_sc_ref, b_sc_ref, o_ref) = refs

    x = x_ref[0]                              # (C, TT) f32
    C, TT = x.shape
    x_c = x.astype(compute_dtype)             # single full-tile cast

    # Left context for the causal dilated conv, already in compute dtype.
    if tiled:
        j = pl.program_id(1)
        ctx = xh_ref[0].astype(compute_dtype)           # (C, ctx_w)
        ctx = ctx * (j > 0).astype(ctx.dtype)           # first tile: zeros
    else:
        ctx = jnp.zeros((C, ctx_w), compute_dtype)

    # Haloed tile; concat boundary is 128-aligned by construction.
    xpad = jnp.concatenate([ctx, x_c], axis=-1)         # (C, ctx_w + TT) bf16

    w_flat = w_in_ref[...]                               # (C, K*C) = [W0|W1|..]

    def tap(k):
        shift = (ksize - 1 - k) * dilation               # static python int
        if shift == 0:
            return x_c
        return xpad[:, ctx_w - shift: ctx_w - shift + TT]

    if stack_taps:
        # Small C: one MXU matmul over the stacked (K*C, TT) operand.
        xs = jnp.concatenate([tap(k) for k in range(ksize)], axis=0)
        acc = jnp.dot(w_flat, xs, preferred_element_type=jnp.float32)
    else:
        acc = jnp.dot(w_flat[:, (ksize - 1) * C:], tap(ksize - 1),
                      preferred_element_type=jnp.float32)
        for k in range(ksize - 1):
            acc = acc + jnp.dot(w_flat[:, k * C:(k + 1) * C], tap(k),
                                preferred_element_type=jnp.float32)

    h = _elu(acc + b_in_ref[...])                         # (C, TT) f32

    # conv_out: 1x1 conv on h.
    y = _elu(jnp.dot(w_out_ref[...], h.astype(compute_dtype),
                     preferred_element_type=jnp.float32) + b_out_ref[...])
    # conv_shortcuts: 1x1 conv on the original input.
    s = _elu(jnp.dot(w_sc_ref[...], x_c,
                     preferred_element_type=jnp.float32) + b_sc_ref[...])

    o_ref[0] = (s + y).astype(o_ref.dtype)


def _vmem_capacity_bytes():
    try:
        info = pltpu.get_tpu_info()
        cap = getattr(info, "vmem_capacity_bytes", None)
        if cap:
            return int(cap)
    except Exception:
        pass
    return 64 * 1024 * 1024   # conservative default (v7x per-TensorCore VMEM)


def _derive_tile_blocks(C, K, itemsize, vmem_cap, max_tile_t):
    """Largest time-tile size (in 128-sample blocks) the VMEM budget allows."""
    per_blk = _LANE * C * (2 * 4                 # x tile, double-buffered, f32
                           + 2 * 4               # out tile, double-buffered
                           + 4 * 4               # f32 temps (acc, h, y, s)
                           + itemsize * (K + 3))  # bf16 xpad + taps / stack
    fixed = 2 * ((K + 2) * C * C * itemsize + 3 * C * 4) + (2 << 20)
    budget = int(vmem_cap * 0.45)
    blk = max(1, (budget - fixed) // per_blk)
    return int(min(blk, max(1, max_tile_t // _LANE)))


def res_unit_pallas(x_nct, params, dilation, *, max_tile_t=2048):
    """x_nct: (B, C, T) float32 (PyTorch NCW). Returns (B, C, T) float32."""
    B, C, T = x_nct.shape
    K = params["w_in"].shape[1] // C
    cdt = params["w_in"].dtype
    itemsize = jnp.dtype(cdt).itemsize

    halo = (K - 1) * dilation
    halo_blocks = max(1, -(-halo // _LANE))
    n_blocks = -(-T // _LANE)

    vmem_cap = _vmem_capacity_bytes()
    tile_blocks = min(n_blocks,
                      _derive_tile_blocks(C, K, itemsize, vmem_cap, max_tile_t))
    if B == 1 and n_blocks >= 2:
        # Keep >= 2 time tiles so both v7x TensorCores get work when B == 1.
        tile_blocks = min(tile_blocks, -(-n_blocks // 2))
    # The causal halo must fit inside one tile of left context.
    tile_blocks = max(tile_blocks, min(halo_blocks, n_blocks))

    n_t = -(-n_blocks // tile_blocks)
    tile_t = tile_blocks * _LANE
    T_pad = n_t * tile_t
    tiled = n_t > 1                       # untiled only for single-tile cases

    if T_pad != T:
        # Right-pad (causal conv ignores the future); keeps stores lane-dense.
        x_nct = jnp.pad(x_nct, ((0, 0), (0, 0), (0, T_pad - T)))

    if tiled:
        # ctx_w: smallest 128-multiple >= halo that divides tile_t, so the
        # halo BlockSpec can address the last ctx_w samples of the prev tile.
        d = halo_blocks
        while tile_blocks % d != 0:
            d += 1
        ctx_w = d * _LANE
        ratio = tile_blocks // d
    else:
        ctx_w = halo_blocks * _LANE       # zeros generated in-kernel
        ratio = 1

    stack_taps = C < 128

    kernel = functools.partial(
        _res_unit_kernel, dilation=dilation, ksize=K, tiled=tiled,
        ctx_w=ctx_w, stack_taps=stack_taps, compute_dtype=cdt)

    # --- VMEM budget / limit (generation aware) ---
    act = C * tile_t * 4
    halo_bytes = C * ctx_w * 4 if tiled else 0
    wgt = (K + 2) * C * C * itemsize + 3 * C * 4
    temps = 4 * act + C * (tile_t + ctx_w) * itemsize * (K + 1)
    vmem_need = 2 * (2 * act + halo_bytes) + 2 * wgt + temps
    headroom = 16 * 1024 * 1024
    vmem_limit = int(min(max(vmem_need + (4 << 20), 16 << 20),
                         vmem_cap - headroom))

    cost = pl.CostEstimate(
        flops=int(2 * B * T_pad * C * C * (K + 2)),
        transcendentals=int(3 * B * T_pad * C),
        bytes_accessed=int(2 * B * C * T_pad * 4 + B * n_t * halo_bytes + wgt),
    )

    w_specs = [
        pl.BlockSpec((C, K * C), lambda *_: (0, 0)),   # w_in (flat)
        pl.BlockSpec((C, 1),     lambda *_: (0, 0)),   # b_in
        pl.BlockSpec((C, C),     lambda *_: (0, 0)),   # w_out
        pl.BlockSpec((C, 1),     lambda *_: (0, 0)),   # b_out
        pl.BlockSpec((C, C),     lambda *_: (0, 0)),   # w_sc
        pl.BlockSpec((C, 1),     lambda *_: (0, 0)),   # b_sc
    ]

    if tiled:
        in_specs = [
            pl.BlockSpec((1, C, tile_t), lambda b, j: (b, 0, j)),      # x
            pl.BlockSpec((1, C, ctx_w),                                # halo
                         lambda b, j, r=ratio: (b, 0, jnp.maximum(j * r - 1, 0))),
            *w_specs,
        ]
        out_spec = pl.BlockSpec((1, C, tile_t), lambda b, j: (b, 0, j))
        grid = (B, n_t)
        dims = ("parallel", "parallel")
        args = (x_nct, x_nct, params["w_in"], params["b_in"], params["w_out"],
                params["b_out"], params["w_sc"], params["b_sc"])
    else:
        in_specs = [
            pl.BlockSpec((1, C, tile_t), lambda b: (b, 0, 0)),         # x only
            *w_specs,
        ]
        out_spec = pl.BlockSpec((1, C, tile_t), lambda b: (b, 0, 0))
        grid = (B,)
        dims = ("parallel",)
        args = (x_nct, params["w_in"], params["b_in"], params["w_out"],
                params["b_out"], params["w_sc"], params["b_sc"])

    out = pl.pallas_call(
        kernel,
        out_shape=jax.ShapeDtypeStruct((B, C, T_pad), jnp.float32),
        grid=grid,
        in_specs=in_specs,
        out_specs=out_spec,
        compiler_params=pltpu.CompilerParams(
            dimension_semantics=dims, vmem_limit_bytes=vmem_limit),
        cost_estimate=cost,
    )(*args)

    return out[..., :T] if T_pad != T else out


# ----------------------------- parameter setup ------------------------------
def _weight_norm(v):
    """PyTorch weight_norm(dim=0) at init: g = ||v|| per out-channel => w == v.
    Kept explicit so the weight-norm semantics stay visible."""
    norm = jnp.sqrt(jnp.sum(v * v, axis=(1, 2), keepdims=True))
    g = norm
    return g * v / jnp.maximum(norm, 1e-12)


def make_params(key, channels, ksize=3, compute_dtype=jnp.bfloat16):
    ks = jax.random.split(key, 6)
    scale = 0.1
    # PyTorch Conv1d weight layout: (out, in, k)
    v_in = scale * jax.random.normal(ks[0], (channels, channels, ksize), jnp.float32)
    v_out = scale * jax.random.normal(ks[1], (channels, channels, 1), jnp.float32)
    v_sc = scale * jax.random.normal(ks[2], (channels, channels, 1), jnp.float32)
    w_in, w_out, w_sc = _weight_norm(v_in), _weight_norm(v_out), _weight_norm(v_sc)
    b_in = scale * jax.random.normal(ks[3], (channels,), jnp.float32)
    b_out = scale * jax.random.normal(ks[4], (channels,), jnp.float32)
    b_sc = scale * jax.random.normal(ks[5], (channels,), jnp.float32)
    # conv_in weight flattened as [W0 | W1 | ... | W_{K-1}] along c_in; tap k
    # pairs with input shift (K-1-k)*dilation.  bf16 for the MXU.
    w_in_flat = jnp.concatenate([w_in[:, :, k] for k in range(ksize)], axis=1)
    return {
        "w_in": w_in_flat.astype(compute_dtype),        # (C, K*C)
        "w_out": w_out[:, :, 0].astype(compute_dtype),  # (C, C)
        "w_sc": w_sc[:, :, 0].astype(compute_dtype),    # (C, C)
        # Biases stay f32, shaped (C, 1) to broadcast over lanes (time).
        "b_in": b_in[:, None],
        "b_out": b_out[:, None],
        "b_sc": b_sc[:, None],
    }


# ------------------------------- pure-JAX ref --------------------------------
def res_unit_ref(x_nct, params, dilation):
    cdt = params["w_in"].dtype
    B, C, T = x_nct.shape
    K = params["w_in"].shape[1] // C
    xb = x_nct.astype(cdt)
    acc = jnp.zeros((B, C, T), jnp.float32)
    for k in range(K):
        shift = (K - 1 - k) * dilation
        xs = jnp.pad(xb, ((0, 0), (0, 0), (shift, 0)))[..., :T]
        wk = params["w_in"][:, k * C:(k + 1) * C]
        acc = acc + jnp.einsum("oi,bit->bot", wk, xs,
                               preferred_element_type=jnp.float32)
    h = _elu(acc + params["b_in"][None])
    y = _elu(jnp.einsum("oi,bit->bot", params["w_out"], h.astype(cdt),
                        preferred_element_type=jnp.float32)
             + params["b_out"][None])
    s = _elu(jnp.einsum("oi,bit->bot", params["w_sc"], xb,
                        preferred_element_type=jnp.float32)
             + params["b_sc"][None])
    return s + y


if __name__ == "__main__":
    key = jax.random.PRNGKey(0)
    configs = [
        dict(B=2, C=16, T=1024, dilation=3),    # stacked taps, grid over batch
        dict(B=1, C=8,  T=96,   dilation=9),    # T%128 != 0 -> padded, untiled
        dict(B=1, C=16, T=512,  dilation=81),   # halo 162 > 128, tiled halo path
        dict(B=1, C=128, T=256, dilation=1),    # per-tap path (C >= 128), 2 tiles
    ]
    for cfg in configs:
        key, kx, kp = jax.random.split(key, 3)
        x = jax.random.normal(kx, (cfg["B"], cfg["C"], cfg["T"]), jnp.float32)
        params = make_params(kp, cfg["C"], ksize=3)

        out = jax.block_until_ready(res_unit_pallas(x, params, cfg["dilation"]))
        ref = res_unit_ref(x, params, cfg["dilation"])

        assert out.shape == x.shape, (out.shape, x.shape)
        max_err = float(jnp.max(jnp.abs(out - ref)))
        assert jnp.allclose(out, ref, rtol=1e-3, atol=1e-4), (cfg, max_err)

    print("KERNEL_OK")
</pallas_src>

<mosaic_0001>
module attributes {stable_mosaic.version = 11 : i64} {
  func.func @_res_unit_kernel(%arg0: i32, %arg1: memref<1x16x1024xf32, #tpu.memory_space<vmem>>, %arg2: memref<16x48xbf16, #tpu.memory_space<vmem>>, %arg3: memref<16x1xf32, #tpu.memory_space<vmem>>, %arg4: memref<16x16xbf16, #tpu.memory_space<vmem>>, %arg5: memref<16x1xf32, #tpu.memory_space<vmem>>, %arg6: memref<16x16xbf16, #tpu.memory_space<vmem>>, %arg7: memref<16x1xf32, #tpu.memory_space<vmem>>, %arg8: memref<1x16x1024xf32, #tpu.memory_space<vmem>>) attributes {dimension_semantics = [#tpu.dimension_semantics<parallel>], iteration_bounds = array<i64: 2>, scalar_prefetch = 0 : i64, scratch_operands = 0 : i64, tpu.core_type = #tpu.core_type<tc>, window_params = [{transform_indices = @transform_0, window_bounds = array<i64: 1, 16, 1024>}, {pipeline_mode = #tpu.pipeline_mode<synchronous>, transform_indices = @transform_1, window_bounds = array<i64: 16, 48>}, {pipeline_mode = #tpu.pipeline_mode<synchronous>, transform_indices = @transform_2, window_bounds = array<i64: 16, 1>}, {pipeline_mode = #tpu.pipeline_mode<synchronous>, transform_indices = @transform_3, window_bounds = array<i64: 16, 16>}, {pipeline_mode = #tpu.pipeline_mode<synchronous>, transform_indices = @transform_4, window_bounds = array<i64: 16, 1>}, {pipeline_mode = #tpu.pipeline_mode<synchronous>, transform_indices = @transform_5, window_bounds = array<i64: 16, 16>}, {pipeline_mode = #tpu.pipeline_mode<synchronous>, transform_indices = @transform_6, window_bounds = array<i64: 16, 1>}, {transform_indices = @transform_7, window_bounds = array<i64: 1, 16, 1024>}]} {
    %c0 = arith.constant 0 : index
    %c0_0 = arith.constant 0 : index
    %c0_1 = arith.constant 0 : index
    %0 = vector.load %arg1[%c0, %c0_0, %c0_1] : memref<1x16x1024xf32, #tpu.memory_space<vmem>>, vector<1x16x1024xf32>
    %1 = vector.shape_cast %0 : vector<1x16x1024xf32> to vector<16x1024xf32>
    %2 = arith.truncf %1 : vector<16x1024xf32> to vector<16x1024xbf16>
    %cst = arith.constant 0.000000e+00 : bf16
    %3 = vector.broadcast %cst : bf16 to vector<16x128xbf16>
    %4 = tpu.concatenate %3, %2 in 1 : vector<16x128xbf16>, vector<16x1024xbf16> -> vector<16x1152xbf16>
    %c0_2 = arith.constant 0 : index
    %c0_3 = arith.constant 0 : index
    %5 = vector.load %arg2[%c0_2, %c0_3] : memref<16x48xbf16, #tpu.memory_space<vmem>>, vector<16x48xbf16>
    %6 = vector.extract_strided_slice %4 {offsets = [0, 122], sizes = [16, 1024], strides = [1, 1]} : vector<16x1152xbf16> to vector<16x1024xbf16>
    %7 = vector.extract_strided_slice %4 {offsets = [0, 125], sizes = [16, 1024], strides = [1, 1]} : vector<16x1152xbf16> to vector<16x1024xbf16>
    %8 = tpu.concatenate %6, %7, %2 in 0 : vector<16x1024xbf16>, vector<16x1024xbf16>, vector<16x1024xbf16> -> vector<48x1024xbf16>
    %cst_4 = arith.constant dense<0.000000e+00> : vector<16x1024xf32>
    %9 = tpu.matmul %5, %8, %cst_4 {dimension_numbers = #tpu.dot_dimension_numbers<[1], [0], [0], [1], [0, 0, 1, 1], [], []>} : vector<16x48xbf16>, vector<48x1024xbf16>, vector<16x1024xf32> -> vector<16x1024xf32>
    %c0_5 = arith.constant 0 : index
    %c0_6 = arith.constant 0 : index
    %10 = vector.load %arg3[%c0_5, %c0_6] : memref<16x1xf32, #tpu.memory_space<vmem>>, vector<16x1xf32>
    %11 = vector.broadcast %10 : vector<16x1xf32> to vector<16x1024xf32>
    %12 = arith.addf %9, %11 : vector<16x1024xf32>
    %cst_7 = arith.constant 0.000000e+00 : f32
    %13 = vector.broadcast %cst_7 : f32 to vector<16x1024xf32>
    %14 = arith.cmpf ogt, %12, %13 : vector<16x1024xf32>
    %cst_8 = arith.constant 0.000000e+00 : f32
    %15 = vector.broadcast %cst_8 : f32 to vector<16x1024xf32>
    %16 = arith.minimumf %12, %15 : vector<16x1024xf32>
    %17 = math.exp %16 : vector<16x1024xf32>
    %cst_9 = arith.constant 1.000000e+00 : f32
    %18 = vector.broadcast %cst_9 : f32 to vector<16x1024xf32>
    %19 = arith.subf %17, %18 : vector<16x1024xf32>
    %20 = arith.select %14, %12, %19 : vector<16x1024xi1>, vector<16x1024xf32>
    %c0_10 = arith.constant 0 : index
    %c0_11 = arith.constant 0 : index
    %21 = vector.load %arg4[%c0_10, %c0_11] : memref<16x16xbf16, #tpu.memory_space<vmem>>, vector<16x16xbf16>
    %22 = arith.truncf %20 : vector<16x1024xf32> to vector<16x1024xbf16>
    %cst_12 = arith.constant dense<0.000000e+00> : vector<16x1024xf32>
    %23 = tpu.matmul %21, %22, %cst_12 {dimension_numbers = #tpu.dot_dimension_numbers<[1], [0], [0], [1], [0, 0, 1, 1], [], []>} : vector<16x16xbf16>, vector<16x1024xbf16>, vector<16x1024xf32> -> vector<16x1024xf32>
    %c0_13 = arith.constant 0 : index
    %c0_14 = arith.constant 0 : index
    %24 = vector.load %arg5[%c0_13, %c0_14] : memref<16x1xf32, #tpu.memory_space<vmem>>, vector<16x1xf32>
    %25 = vector.broadcast %24 : vector<16x1xf32> to vector<16x1024xf32>
    %26 = arith.addf %23, %25 : vector<16x1024xf32>
    %cst_15 = arith.constant 0.000000e+00 : f32
    %27 = vector.broadcast %cst_15 : f32 to vector<16x1024xf32>
    %28 = arith.cmpf ogt, %26, %27 : vector<16x1024xf32>
    %cst_16 = arith.constant 0.000000e+00 : f32
    %29 = vector.broadcast %cst_16 : f32 to vector<16x1024xf32>
    %30 = arith.minimumf %26, %29 : vector<16x1024xf32>
    %31 = math.exp %30 : vector<16x1024xf32>
    %cst_17 = arith.constant 1.000000e+00 : f32
    %32 = vector.broadcast %cst_17 : f32 to vector<16x1024xf32>
    %33 = arith.subf %31, %32 : vector<16x1024xf32>
    %34 = arith.select %28, %26, %33 : vector<16x1024xi1>, vector<16x1024xf32>
    %c0_18 = arith.constant 0 : index
    %c0_19 = arith.constant 0 : index
    %35 = vector.load %arg6[%c0_18, %c0_19] : memref<16x16xbf16, #tpu.memory_space<vmem>>, vector<16x16xbf16>
    %cst_20 = arith.constant dense<0.000000e+00> : vector<16x1024xf32>
    %36 = tpu.matmul %35, %2, %cst_20 {dimension_numbers = #tpu.dot_dimension_numbers<[1], [0], [0], [1], [0, 0, 1, 1], [], []>} : vector<16x16xbf16>, vector<16x1024xbf16>, vector<16x1024xf32> -> vector<16x1024xf32>
    %c0_21 = arith.constant 0 : index
    %c0_22 = arith.constant 0 : index
    %37 = vector.load %arg7[%c0_21, %c0_22] : memref<16x1xf32, #tpu.memory_space<vmem>>, vector<16x1xf32>
    %38 = vector.broadcast %37 : vector<16x1xf32> to vector<16x1024xf32>
    %39 = arith.addf %36, %38 : vector<16x1024xf32>
    %cst_23 = arith.constant 0.000000e+00 : f32
    %40 = vector.broadcast %cst_23 : f32 to vector<16x1024xf32>
    %41 = arith.cmpf ogt, %39, %40 : vector<16x1024xf32>
    %cst_24 = arith.constant 0.000000e+00 : f32
    %42 = vector.broadcast %cst_24 : f32 to vector<16x1024xf32>
    %43 = arith.minimumf %39, %42 : vector<16x1024xf32>
    %44 = math.exp %43 : vector<16x1024xf32>
    %cst_25 = arith.constant 1.000000e+00 : f32
    %45 = vector.broadcast %cst_25 : f32 to vector<16x1024xf32>
    %46 = arith.subf %44, %45 : vector<16x1024xf32>
    %47 = arith.select %41, %39, %46 : vector<16x1024xi1>, vector<16x1024xf32>
    %48 = arith.addf %47, %34 : vector<16x1024xf32>
    %c0_26 = arith.constant 0 : index
    %c0_27 = arith.constant 0 : index
    %c0_28 = arith.constant 0 : index
    %49 = vector.load %arg8[%c0_26, %c0_27, %c0_28] : memref<1x16x1024xf32, #tpu.memory_space<vmem>>, vector<1x16x1024xf32>
    %50 = vector.shape_cast %49 : vector<1x16x1024xf32> to vector<16x1024xf32>
    %51 = vector.shape_cast %48 : vector<16x1024xf32> to vector<1x16x1024xf32>
    tpu.vector_store %arg8[%c0_26, %c0_27, %c0_28], %51 {strides = array<i32>} : memref<1x16x1024xf32, #tpu.memory_space<vmem>>, vector<1x16x1024xf32>,
    return
  }
  func.func @transform_0(%arg0: i32) -> (i32, i32, i32) {
    %c0_i32 = arith.constant 0 : i32
    %c0_i32_0 = arith.constant 0 : i32
    %c0_i32_1 = arith.constant 0 : i32
    return %arg0, %c0_i32, %c0_i32_0 : i32, i32, i32
  }
  func.func @transform_1(%arg0: i32) -> (i32, i32) {
    %c0_i32 = arith.constant 0 : i32
    %c0_i32_0 = arith.constant 0 : i32
    %c0_i32_1 = arith.constant 0 : i32
    return %c0_i32, %c0_i32_0 : i32, i32
  }
  func.func @transform_2(%arg0: i32) -> (i32, i32) {
    %c0_i32 = arith.constant 0 : i32
    %c0_i32_0 = arith.constant 0 : i32
    %c0_i32_1 = arith.constant 0 : i32
    return %c0_i32, %c0_i32_0 : i32, i32
  }
  func.func @transform_3(%arg0: i32) -> (i32, i32) {
    %c0_i32 = arith.constant 0 : i32
    %c0_i32_0 = arith.constant 0 : i32
    %c0_i32_1 = arith.constant 0 : i32
    return %c0_i32, %c0_i32_0 : i32, i32
  }
  func.func @transform_4(%arg0: i32) -> (i32, i32) {
    %c0_i32 = arith.constant 0 : i32
    %c0_i32_0 = arith.constant 0 : i32
    %c0_i32_1 = arith.constant 0 : i32
    return %c0_i32, %c0_i32_0 : i32, i32
  }
  func.func @transform_5(%arg0: i32) -> (i32, i32) {
    %c0_i32 = arith.constant 0 : i32
    %c0_i32_0 = arith.constant 0 : i32
    %c0_i32_1 = arith.constant 0 : i32
    return %c0_i32, %c0_i32_0 : i32, i32
  }
  func.func @transform_6(%arg0: i32) -> (i32, i32) {
    %c0_i32 = arith.constant 0 : i32
    %c0_i32_0 = arith.constant 0 : i32
    %c0_i32_1 = arith.constant 0 : i32
    return %c0_i32, %c0_i32_0 : i32, i32
  }
  func.func @transform_7(%arg0: i32) -> (i32, i32, i32) {
    %c0_i32 = arith.constant 0 : i32
    %c0_i32_0 = arith.constant 0 : i32
    %c0_i32_1 = arith.constant 0 : i32
    return %arg0, %c0_i32, %c0_i32_0 : i32, i32, i32
  }
}

</mosaic_0001>

<llo_original>
// kernel: tpu_custom_call.1
$region0: #{tpu_custom_call.1}
  #allocation0 [shape = 'u32[]', space=smem, size = 0x4, offset = 0x4, fixed_abs, tag = 'smem constant byte address 0x4 - core index']
  #allocation1 [shape = 'u32[72,128]{1,0:T(1,128)}', space=vmem, size = 0x9000, scoped, tag = 'internal scratch']
  %s0 = inlined_call_operand.hbm [shape: f32[2,16,1024], index: 0, kind: input, shape index: {}]
  %s1 = inlined_call_operand.vmem [shape: bf16[16,48], index: 1, kind: input, shape index: {}]
  %s2 = inlined_call_operand.vmem [shape: f32[16,1], index: 2, kind: input, shape index: {}]
  %s3 = inlined_call_operand.vmem [shape: bf16[16,16], index: 3, kind: input, shape index: {}]
  %s4 = inlined_call_operand.vmem [shape: f32[16,1], index: 4, kind: input, shape index: {}]
  %s5 = inlined_call_operand.vmem [shape: bf16[16,16], index: 5, kind: input, shape index: {}]
  %s6 = inlined_call_operand.vmem [shape: f32[16,1], index: 6, kind: input, shape index: {}]
  %s7 = inlined_call_operand.hbm [shape: f32[2,16,1024], index: 7, kind: output, shape index: {}]
  %s8 = sld [smem:[#allocation0]]
  $region65: #{tpu_custom_call.1} parent=0
    _
  %s10 = ssub.s32 1, %s8
  %s11 = scalar_select 0, %s10, %s8
  $region1: #{tpu_custom_call.1} parent=0
    #allocation2 [shape = 'u8[131072]{0}', space=vmem, size = 0x20000, scoped, tag = 'input window, operand 0']
    #allocation3 [shape = 's32[2]{0}', space=sflag, size = 0x8, scoped, tag = 'scoped memory for tpu_custom_call.1']
    #allocation4 [shape = 's32[2]{0}', space=sflag, size = 0x8, scoped, tag = 'scoped memory for tpu_custom_call.1']
    #allocation5 [shape = 'u8[131072]{0}', space=vmem, size = 0x20000, scoped, tag = 'output window, operand 0']
    %12 = vsyncpa [#allocation3], 0
    %s13 = scalar_lea.sflag [#allocation3], 1
    %14 = vsyncpa %s13, 0
    %15 = vsyncpa [#allocation4], 0
    %s16 = scalar_lea.sflag [#allocation4], 1
    %17 = vsyncpa %s16, 0
    loop: start=0, step=1, limit=4
    $region2: #{tpu_custom_call.1} parent=1 // loop_pre_header
      _
    $region3: #{tpu_custom_call.1} parent=1 // loop_header
      %s19 = sphi 0, %s23
      %p20 = scmp.ge.s32.totalorder %s19, 4
      %s29 = sphi 0, %s31
      %s32 = sphi 0, %s29
      %s33 = sphi 0, %s32
      %s49 = sphi 0, %s33
      %s53 = sphi 0, %s53
      %s55 = sphi 0, %s53
      %s56 = sphi 0, %s55
      %s70 = sphi 0, %s56
      %s74 = sphi 0, %s74
      %s76 = sphi 0, %s74
      %s77 = sphi 0, %s76
      %s91 = sphi 0, %s77
      %s95 = sphi 0, %s95
      %s97 = sphi 0, %s95
      %s98 = sphi 0, %s97
      %s112 = sphi 0, %s98
      %s116 = sphi 0, %s116
      %s118 = sphi 0, %s116
      %s119 = sphi 0, %s118
      %s133 = sphi 0, %s119
      %s137 = sphi 0, %s137
      %s139 = sphi 0, %s137
      %s140 = sphi 0, %s139
      %s154 = sphi 0, %s140
      %s158 = sphi 0, %s158
      %s160 = sphi 0, %s158
      %s161 = sphi 0, %s160
      %s175 = sphi 0, %s161
      %s181 = sphi 0, %s183
      %s184 = sphi 0, %s181
      %s185 = sphi 0, %s184
      %s201 = sphi 0, %s185
    $region4: #{tpu_custom_call.1} parent=1 // loop_header_branch
      %22 = sbr.rel (%p20) target = $region8
    $region5: #{tpu_custom_call.1} parent=1 // loop_body
      %s24 = ssub.s32 %s19, 1
      %s25 = ssub.s32 %s19, 2
      %s26 = sadd.s32 %s19, 1
      %s27 = ssub.s32 %s19, %s26
      %p28 = scmp.eq.s32.totalorder %s27, 0
      %s30 = sadd.s32 %s29, 1
      %s31 = scalar_select %p28, %s29, %s30
      %p34 = pneg %p28
      %p35 = scmp.eq.s32.totalorder %s19, 1
      %p36 = por %p34, %p35
      %p37 = scmp.ne.s32.totalorder %s29, %s32
      %p38 = scmp.eq.s32.totalorder %s19, 0
      %p39 = por %p37, %p38
      %p40 = scmp.ne.s32.totalorder %s29, %s32
      %p41 = scmp.eq.s32.totalorder %s24, 1
      %p42 = por %p40, %p41
      %p43 = scmp.ne.s32.totalorder %s32, %s33
      %p44 = scmp.eq.s32.totalorder %s24, 0
      %p45 = por %p43, %p44
      %p46 = scmp.ne.s32.totalorder %s32, %s33
      %p47 = scmp.eq.s32.totalorder %s25, 1
      %p48 = por %p46, %p47
      %p50 = scmp.ne.s32.totalorder %s33, %s49
      %p51 = scmp.eq.s32.totalorder %s25, 0
      %p52 = por %p50, %p51
      %s54 = sadd.s32 %s53, 1
      %p57 = scmp.eq.s32.totalorder %s19, 1
      %p58 = scmp.ne.s32.totalorder %s53, %s55
      %p59 = scmp.eq.s32.totalorder %s19, 0
      %p60 = por %p58, %p59
      %p61 = scmp.ne.s32.totalorder %s53, %s55
      %p62 = scmp.eq.s32.totalorder %s24, 1
      %p63 = por %p61, %p62
      %p64 = scmp.ne.s32.totalorder %s55, %s56
      %p65 = scmp.eq.s32.totalorder %s24, 0
      %p66 = por %p64, %p65
      %p67 = scmp.ne.s32.totalorder %s55, %s56
      %p68 = scmp.eq.s32.totalorder %s25, 1
      %p69 = por %p67, %p68
      %p71 = scmp.ne.s32.totalorder %s56, %s70
      %p72 = scmp.eq.s32.totalorder %s25, 0
      %p73 = por %p71, %p72
      %s75 = sadd.s32 %s74, 1
      %p78 = scmp.eq.s32.totalorder %s19, 1
      %p79 = scmp.ne.s32.totalorder %s74, %s76
      %p80 = scmp.eq.s32.totalorder %s19, 0
      %p81 = por %p79, %p80
      %p82 = scmp.ne.s32.totalorder %s74, %s76
      %p83 = scmp.eq.s32.totalorder %s24, 1
      %p84 = por %p82, %p83
      %p85 = scmp.ne.s32.totalorder %s76, %s77
      %p86 = scmp.eq.s32.totalorder %s24, 0
      %p87 = por %p85, %p86
      %p88 = scmp.ne.s32.totalorder %s76, %s77
      %p89 = scmp.eq.s32.totalorder %s25, 1
      %p90 = por %p88, %p89
      %p92 = scmp.ne.s32.totalorder %s77, %s91
      %p93 = scmp.eq.s32.totalorder %s25, 0
      %p94 = por %p92, %p93
      %s96 = sadd.s32 %s95, 1
      %p99 = scmp.eq.s32.totalorder %s19, 1
      %p100 = scmp.ne.s32.totalorder %s95, %s97
      %p101 = scmp.eq.s32.totalorder %s19, 0
      %p102 = por %p100, %p101
      %p103 = scmp.ne.s32.totalorder %s95, %s97
      %p104 = scmp.eq.s32.totalorder %s24, 1
      %p105 = por %p103, %p104
      %p106 = scmp.ne.s32.totalorder %s97, %s98
      %p107 = scmp.eq.s32.totalorder %s24, 0
      %p108 = por %p106, %p107
      %p109 = scmp.ne.s32.totalorder %s97, %s98
      %p110 = scmp.eq.s32.totalorder %s25, 1
      %p111 = por %p109, %p110
      %p113 = scmp.ne.s32.totalorder %s98, %s112
      %p114 = scmp.eq.s32.totalorder %s25, 0
      %p115 = por %p113, %p114
      %s117 = sadd.s32 %s116, 1
      %p120 = scmp.eq.s32.totalorder %s19, 1
      %p121 = scmp.ne.s32.totalorder %s116, %s118
      %p122 = scmp.eq.s32.totalorder %s19, 0
      %p123 = por %p121, %p122
      %p124 = scmp.ne.s32.totalorder %s116, %s118
      %p125 = scmp.eq.s32.totalorder %s24, 1
      %p126 = por %p124, %p125
      %p127 = scmp.ne.s32.totalorder %s118, %s119
      %p128 = scmp.eq.s32.totalorder %s24, 0
      %p129 = por %p127, %p128
      %p130 = scmp.ne.s32.totalorder %s118, %s119
      %p131 = scmp.eq.s32.totalorder %s25, 1
      %p132 = por %p130, %p131
      %p134 = scmp.ne.s32.totalorder %s119, %s133
      %p135 = scmp.eq.s32.totalorder %s25, 0
      %p136 = por %p134, %p135
      %s138 = sadd.s32 %s137, 1
      %p141 = scmp.eq.s32.totalorder %s19, 1
      %p142 = scmp.ne.s32.totalorder %s137, %s139
      %p143 = scmp.eq.s32.totalorder %s19, 0
      %p144 = por %p142, %p143
      %p145 = scmp.ne.s32.totalorder %s137, %s139
      %p146 = scmp.eq.s32.totalorder %s24, 1
      %p147 = por %p145, %p146
      %p148 = scmp.ne.s32.totalorder %s139, %s140
      %p149 = scmp.eq.s32.totalorder %s24, 0
      %p150 = por %p148, %p149
      %p151 = scmp.ne.s32.totalorder %s139, %s140
      %p152 = scmp.eq.s32.totalorder %s25, 1
      %p153 = por %p151, %p152
      %p155 = scmp.ne.s32.totalorder %s140, %s154
      %p156 = scmp.eq.s32.totalorder %s25, 0
      %p157 = por %p155, %p156
      %s159 = sadd.s32 %s158, 1
      %p162 = scmp.eq.s32.totalorder %s19, 1
      %p163 = scmp.ne.s32.totalorder %s158, %s160
      %p164 = scmp.eq.s32.totalorder %s19, 0
      %p165 = por %p163, %p164
      %p166 = scmp.ne.s32.totalorder %s158, %s160
      %p167 = scmp.eq.s32.totalorder %s24, 1
      %p168 = por %p166, %p167
      %p169 = scmp.ne.s32.totalorder %s160, %s161
      %p170 = scmp.eq.s32.totalorder %s24, 0
      %p171 = por %p169, %p170
      %p172 = scmp.ne.s32.totalorder %s160, %s161
      %p173 = scmp.eq.s32.totalorder %s25, 1
      %p174 = por %p172, %p173
      %p176 = scmp.ne.s32.totalorder %s161, %s175
      %p177 = scmp.eq.s32.totalorder %s25, 0
      %p178 = por %p176, %p177
      %s179 = ssub.s32 %s19, %s26
      %p180 = scmp.eq.s32.totalorder %s179, 0
      %s182 = sadd.s32 %s181, 1
      %s183 = scalar_select %p180, %s181, %s182
      %p186 = pneg %p180
      %p187 = scmp.eq.s32.totalorder %s19, 1
      %p188 = por %p186, %p187
      %p189 = scmp.ne.s32.totalorder %s181, %s184
      %p190 = scmp.eq.s32.totalorder %s19, 0
      %p191 = por %p189, %p190
      %p192 = scmp.ne.s32.totalorder %s181, %s184
      %p193 = scmp.eq.s32.totalorder %s24, 1
      %p194 = por %p192, %p193
      %p195 = scmp.ne.s32.totalorder %s184, %s185
      %p196 = scmp.eq.s32.totalorder %s24, 0
      %p197 = por %p195, %p196
      %p198 = scmp.ne.s32.totalorder %s184, %s185
      %p199 = scmp.eq.s32.totalorder %s25, 1
      %p200 = por %p198, %p199
      %p202 = scmp.ne.s32.totalorder %s185, %s201
      %p203 = scmp.eq.s32.totalorder %s25, 0
      %p204 = por %p202, %p203
      %p205 = scmp.le.s32.totalorder 1, %s19
      %p206 = scmp.lt.s32.totalorder %s19, 3
      %p207 = pnand %p205, %p206
      %p208 = pneg %p207
      // Predicated region
      $region9: #{tpu_custom_call.1} parent=5 // pred_check
        _
      $region10: #{tpu_custom_call.1} parent=5 // pred_check_branch
        %210 = sbr.rel (%p207) target = $region12
      $region11: #{tpu_custom_call.1} parent=5 // pred_region
        %s211 = ssub.s32 %s19, 1
        // Predicated region
        $region13: #{tpu_custom_call.1} parent=11 // pred_check
          %p212 = pneg %p66
        $region14: #{tpu_custom_call.1} parent=11 // pred_check_branch
          %214 = sbr.rel (%p212) target = $region16
        $region15: #{tpu_custom_call.1} parent=11 // pred_region
          _
        $region16: #{tpu_custom_call.1} parent=11 // pred_fallthru
          _
        // Predicated region
        $region17: #{tpu_custom_call.1} parent=11 // pred_check
          %p215 = pneg %p87
        $region18: #{tpu_custom_call.1} parent=11 // pred_check_branch
          %217 = sbr.rel (%p215) target = $region20
        $region19: #{tpu_custom_call.1} parent=11 // pred_region
          _
        $region20: #{tpu_custom_call.1} parent=11 // pred_fallthru
          _
        // Predicated region
        $region21: #{tpu_custom_call.1} parent=11 // pred_check
          %p218 = pneg %p108
        $region22: #{tpu_custom_call.1} parent=11 // pred_check_branch
          %220 = sbr.rel (%p218) target = $region24
        $region23: #{tpu_custom_call.1} parent=11 // pred_region
          _
        $region24: #{tpu_custom_call.1} parent=11 // pred_fallthru
          _
        // Predicated region
        $region25: #{tpu_custom_call.1} parent=11 // pred_check
          %p221 = pneg %p129
        $region26: #{tpu_custom_call.1} parent=11 // pred_check_branch
          %223 = sbr.rel (%p221) target = $region28
        $region27: #{tpu_custom_call.1} parent=11 // pred_region
          _
        $region28: #{tpu_custom_call.1} parent=11 // pred_fallthru
          _
        // Predicated region
        $region29: #{tpu_custom_call.1} parent=11 // pred_check
          %p224 = pneg %p150
        $region30: #{tpu_custom_call.1} parent=11 // pred_check_branch
          %226 = sbr.rel (%p224) target = $region32
        $region31: #{tpu_custom_call.1} parent=11 // pred_region
          _
        $region32: #{tpu_custom_call.1} parent=11 // pred_fallthru
          _
        // Predicated region
        $region33: #{tpu_custom_call.1} parent=11 // pred_check
          %p227 = pneg %p171
        $region34: #{tpu_custom_call.1} parent=11 // pred_check_branch
          %229 = sbr.rel (%p227) target = $region36
        $region35: #{tpu_custom_call.1} parent=11 // pred_region
          _
        $region36: #{tpu_custom_call.1} parent=11 // pred_fallthru
          _
      $region12: #{tpu_custom_call.1} parent=5 // pred_fallthru
        _
      %p230 = scmp.lt.s32.totalorder %s19, 2
      // Predicated region
      $region37: #{tpu_custom_call.1} parent=5 // pred_check
        %p231 = pneg %p230
      $region38: #{tpu_custom_call.1} parent=5 // pred_check_branch
        %233 = sbr.rel (%p231) target = $region40
      $region39: #{tpu_custom_call.1} parent=5 // pred_region
        // Predicated region
        $region41: #{tpu_custom_call.1} parent=39 // pred_check
          %p234 = pneg %p39
        $region42: #{tpu_custom_call.1} parent=39 // pred_check_branch
          %236 = sbr.rel (%p234) target = $region44
        $region43: #{tpu_custom_call.1} parent=39 // pred_region
          %s237 = sand.u32 %s29, 1
          %s238 = scalar_lea.sflag [#allocation3], %s237
          %s239 = sand.u32 %s29, 1
          %s240 = smul.addr %s239, 128
          %s241 = scalar_lea.vmem [#allocation2], %s240
          %243 = vsyncadd %s238, 0
          %s244 = smul.addr %s19, 16
          %s245 = smul.addr %s244, 8
          %s246 = scalar_lea.hbm %s0, %s245
          %s247 = sshll.u32 %s246, 4
          %s248 = int_to_ptr.hbm [resolvable:$true] %s247
          %s249 = sshll.u32 %s241, 4
          %s250 = int_to_ptr.vmem [resolvable:$true] %s249
          %255 = dma.hbm_to_vmem [thread:$0]  %s248, 2048, %s250, %s238, 1024, 1024, 64
        $region44: #{tpu_custom_call.1} parent=39 // pred_fallthru
          _
      $region40: #{tpu_custom_call.1} parent=5 // pred_fallthru
        _
      %p256 = scmp.le.s32.totalorder 1, %s19
      %p257 = scmp.lt.s32.totalorder %s19, 3
      %p258 = pnand %p256, %p257
      %p259 = pneg %p258
      // Predicated region
      $region45: #{tpu_custom_call.1} parent=5 // pred_check
        _
      $region46: #{tpu_custom_call.1} parent=5 // pred_check_branch
        %261 = sbr.rel (%p258) target = $region48
      $region47: #{tpu_custom_call.1} parent=5 // pred_region
        %s262 = ssub.s32 %s19, 1
        %s263 = sand.u32 %s32, 1
        %s264 = scalar_lea.sflag [#allocation3], %s263
        %s265 = sand.u32 %s32, 1
        %s266 = smul.addr %s265, 128
        %s267 = scalar_lea.vmem [#allocation2], %s266
        // Predicated region
        $region49: #{tpu_custom_call.1} parent=47 // pred_check
          %p268 = pneg %p45
        $region50: #{tpu_custom_call.1} parent=47 // pred_check_branch
          %270 = sbr.rel (%p268) target = $region52
        $region51: #{tpu_custom_call.1} parent=47 // pred_region
          %272 = dma.done %s264, 2048
        $region52: #{tpu_custom_call.1} parent=47 // pred_fallthru
          _
        %s273 = sand.u32 %s32, 1
        %s274 = scalar_lea.sflag [#allocation3], %s273
        %s275 = sand.u32 %s32, 1
        %s276 = smul.addr %s275, 128
        %s277 = scalar_lea.vmem [#allocation2], %s276
        %p278 = pneg %p45
        %p279 = pneg %p42
        %p280 = pneg %p66
        %p281 = pneg %p63
        %p282 = pneg %p87
        %p283 = pneg %p84
        %p284 = pneg %p108
        %p285 = pneg %p105
        %p286 = pneg %p129
        %p287 = pneg %p126
        %p288 = pneg %p150
        %p289 = pneg %p147
        %p290 = pneg %p171
        %p291 = pneg %p168
        %p292 = pneg %p197
        %p293 = pneg %p194
        %s294 = sand.u32 %s184, 1
        %s295 = scalar_lea.sflag [#allocation4], %s294
        %s296 = sand.u32 %s184, 1
        %s297 = smul.addr %s296, 128
        %s298 = scalar_lea.vmem [#allocation5], %s297
        %v300 = vld [vmem:[%s267] sm:$0xff]
        %v301 = vld [vmem:[%s267 + $0x8] sm:$0xff]
        %v302 = vld [vmem:[%s267 + $0x10] sm:$0xff]
        %v303 = vld [vmem:[%s267 + $0x18] sm:$0xff]
        %v304 = vld [vmem:[%s267 + $0x20] sm:$0xff]
        %v305 = vld [vmem:[%s267 + $0x28] sm:$0xff]
        %v306 = vld [vmem:[%s267 + $0x30] sm:$0xff]
        %v307 = vld [vmem:[%s267 + $0x38] sm:$0xff]
        %v308 = vld [vmem:[%s267 + $0x40] sm:$0xff]
        %v309 = vld [vmem:[%s267 + $0x48] sm:$0xff]
        %v310 = vld [vmem:[%s267 + $0x50] sm:$0xff]
        %v311 = vld [vmem:[%s267 + $0x58] sm:$0xff]
        %v312 = vld [vmem:[%s267 + $0x60] sm:$0xff]
        %v313 = vld [vmem:[%s267 + $0x68] sm:$0xff]
        %v314 = vld [vmem:[%s267 + $0x70] sm:$0xff]
        %v315 = vld [vmem:[%s267 + $0x78] sm:$0xff]
        %v316 = vpack.c.bf16 %v301, %v300
        %v317 = vpack.c.bf16 %v303, %v302
        %v318 = vpack.c.bf16 %v305, %v304
        %v319 = vpack.c.bf16 %v307, %v306
        %v320 = vpack.c.bf16 %v309, %v308
        %v321 = vpack.c.bf16 %v311, %v310
        %v322 = vpack.c.bf16 %v313, %v312
        %v323 = vpack.c.bf16 %v315, %v314
        %v332 = vunpack.c.l.b16 %v316
        %v333 = vunpack.c.h.b16 %v316
        %v334 = vunpack.c.l.b16 %v317
        %v335 = vunpack.c.h.b16 %v317
        %v336 = vunpack.c.l.b16 %v318
        %v337 = vunpack.c.h.b16 %v318
        %v338 = vunpack.c.l.b16 %v319
        %v339 = vunpack.c.h.b16 %v319
        %v340 = vunpack.c.l.b16 %v320
        %v341 = vunpack.c.h.b16 %v320
        %v342 = vunpack.c.l.b16 %v321
        %v343 = vunpack.c.h.b16 %v321
        %v344 = vunpack.c.l.b16 %v322
        %v345 = vunpack.c.h.b16 %v322
        %v346 = vunpack.c.l.b16 %v323
        %v347 = vunpack.c.h.b16 %v323
        %v348 = vpack.c.b16 %v340, %v332
        %v349 = vpack.c.b16 %v341, %v333
        %v350 = vpack.c.b16 %v342, %v334
        %v351 = vpack.c.b16 %v343, %v335
        %v352 = vpack.c.b16 %v344, %v336
        %v353 = vpack.c.b16 %v345, %v337
        %v354 = vpack.c.b16 %v346, %v338
        %v355 = vpack.c.b16 %v347, %v339
        %v356 = vld [vmem:[%s1] sm:$0xf]
        %v357 = vld [vmem:[%s1 + $0x4] sm:$0xf]
        %359 = vrot.lane.b32.xlu0 0, 125
        %v360 = vpop.permute.xlu0 %359
        %361 = vrot.lane.b32.xlu0 %v348, 125
        %v362 = vpop.permute.xlu0 %361
        %363 = vrot.lane.b32.xlu0 %v349, 125
        %v364 = vpop.permute.xlu0 %363
        %365 = vrot.lane.b32.xlu0 %v350, 125
        %v366 = vpop.permute.xlu0 %365
        %367 = vrot.lane.b32.xlu0 %v351, 125
        %v368 = vpop.permute.xlu0 %367
        %369 = vrot.lane.b32.xlu0 %v352, 125
        %v370 = vpop.permute.xlu0 %369
        %371 = vrot.lane.b32.xlu0 %v353, 125
        %v372 = vpop.permute.xlu0 %371
        %373 = vrot.lane.b32.xlu0 %v354, 125
        %v374 = vpop.permute.xlu0 %373
        %375 = vrot.lane.b32.xlu0 %v355, 125
        %v376 = vpop.permute.xlu0 %375
        %vm377 = vcmask 1022976
        %v378 = vsel %vm377, %v360, %v362
        %v379 = vsel %vm377, %v362, %v364
        %v380 = vsel %vm377, %v364, %v366
        %v381 = vsel %vm377, %v366, %v368
        %v382 = vsel %vm377, %v368, %v370
        %v383 = vsel %vm377, %v370, %v372
        %v384 = vsel %vm377, %v372, %v374
        %v385 = vsel %vm377, %v374, %v376
        %386 = vrot.lane.b32.xlu0 %v348, 122
        %v387 = vpop.permute.xlu0 %386
        %388 = vrot.lane.b32.xlu0 %v349, 122
        %v389 = vpop.permute.xlu0 %388
        %390 = vrot.lane.b32.xlu0 %v350, 122
        %v391 = vpop.permute.xlu0 %390
        %392 = vrot.lane.b32.xlu0 %v351, 122
        %v393 = vpop.permute.xlu0 %392
        %394 = vrot.lane.b32.xlu0 %v352, 122
        %v395 = vpop.permute.xlu0 %394
        %396 = vrot.lane.b32.xlu0 %v353, 122
        %v397 = vpop.permute.xlu0 %396
        %398 = vrot.lane.b32.xlu0 %v354, 122
        %v399 = vpop.permute.xlu0 %398
        %400 = vrot.lane.b32.xlu0 %v355, 122
        %v401 = vpop.permute.xlu0 %400
        %vm402 = vcmask 998400
        %v403 = vsel %vm402, %v387, %v389
        %v404 = vsel %vm402, %v389, %v391
        %v405 = vsel %vm402, %v391, %v393
        %v406 = vsel %vm402, %v393, %v395
        %v407 = vsel %vm402, %v395, %v397
        %v408 = vsel %vm402, %v397, %v399
        %v409 = vsel %vm402, %v399, %v401
        %v410 = vld [vmem:[%s2] sm:$0xff]
        %v411 = vld [vmem:[%s2 + $0x8] sm:$0xff]
        %413 = vset.pattern.permute.xlu0 0
        %414 = vperm.xlu0 %413, %v410
        %v415 = vpop.permute.xlu0 %414
        %418 = vset.pattern.permute.xlu0 0
        %419 = vperm.xlu0 %418, %v411
        %v420 = vpop.permute.xlu0 %419
        %v424 = vunpack.c.l.b16 %v356
        %v425 = vunpack.c.l.b16 %v357
        %v426 = vpack.c.b16 %v425, %v424
        %427 = vrot.lane.b32.xlu0 0, 6
        %v428 = vpop.permute.xlu0 %427
        %429 = vrot.lane.b32.xlu0 %v348, 6
        %v430 = vpop.permute.xlu0 %429
        %431 = vrot.lane.b32.xlu0 %v349, 6
        %v432 = vpop.permute.xlu0 %431
        %433 = vrot.lane.b32.xlu0 %v350, 6
        %v434 = vpop.permute.xlu0 %433
        %435 = vrot.lane.b32.xlu0 %v351, 6
        %v436 = vpop.permute.xlu0 %435
        %437 = vrot.lane.b32.xlu0 %v352, 6
        %v438 = vpop.permute.xlu0 %437
        %439 = vrot.lane.b32.xlu0 %v353, 6
        %v440 = vpop.permute.xlu0 %439
        %441 = vrot.lane.b32.xlu0 %v354, 6
        %v442 = vpop.permute.xlu0 %441
        %443 = vrot.lane.b32.xlu0 %v355, 6
        %v444 = vpop.permute.xlu0 %443
        %445 = vrot.lane.b32.xlu0 %v378, 6
        %v446 = vpop.permute.xlu0 %445
        %447 = vrot.lane.b32.xlu0 %v379, 6
        %v448 = vpop.permute.xlu0 %447
        %449 = vrot.lane.b32.xlu0 %v380, 6
        %v450 = vpop.permute.xlu0 %449
        %451 = vrot.lane.b32.xlu0 %v381, 6
        %v452 = vpop.permute.xlu0 %451
        %453 = vrot.lane.b32.xlu0 %v382, 6
        %v454 = vpop.permute.xlu0 %453
        %455 = vrot.lane.b32.xlu0 %v383, 6
        %v456 = vpop.permute.xlu0 %455
        %457 = vrot.lane.b32.xlu0 %v384, 6
        %v458 = vpop.permute.xlu0 %457
        %459 = vrot.lane.b32.xlu0 %v385, 6
        %v460 = vpop.permute.xlu0 %459
        %461 = vrot.lane.b32.xlu0 %v376, 6
        %v462 = vpop.permute.xlu0 %461
        %463 = vrot.lane.b32.xlu0 %v387, 6
        %v464 = vpop.permute.xlu0 %463
        %465 = vrot.lane.b32.xlu0 %v403, 6
        %v466 = vpop.permute.xlu0 %465
        %467 = vrot.lane.b32.xlu0 %v404, 6
        %v468 = vpop.permute.xlu0 %467
        %469 = vrot.lane.b32.xlu0 %v405, 6
        %v470 = vpop.permute.xlu0 %469
        %471 = vrot.lane.b32.xlu0 %v406, 6
        %v472 = vpop.permute.xlu0 %471
        %473 = vrot.lane.b32.xlu0 %v407, 6
        %v474 = vpop.permute.xlu0 %473
        %475 = vrot.lane.b32.xlu0 %v408, 6
        %v476 = vpop.permute.xlu0 %475
        %477 = vrot.lane.b32.xlu0 %v409, 6
        %v478 = vpop.permute.xlu0 %477
        %479 = vrot.lane.b32.xlu0 %v401, 6
        %v480 = vpop.permute.xlu0 %479
        %vm481 = vcmask 48128
        %v482 = vsel %vm481, %v428, %v430
        %v483 = vsel %vm481, %v430, %v432
        %v484 = vsel %vm481, %v432, %v434
        %v485 = vsel %vm481, %v434, %v436
        %v486 = vsel %vm481, %v436, %v438
        %v487 = vsel %vm481, %v438, %v440
        %v488 = vsel %vm481, %v440, %v442
        %v489 = vsel %vm481, %v442, %v444
        %v490 = vsel %vm481, %v446, %v448
        %v491 = vsel %vm481, %v448, %v450
        %v492 = vsel %vm481, %v450, %v452
        %v493 = vsel %vm481, %v452, %v454
        %v494 = vsel %vm481, %v454, %v456
        %v495 = vsel %vm481, %v456, %v458
        %v496 = vsel %vm481, %v458, %v460
        %v497 = vsel %vm481, %v460, %v462
        %v498 = vsel %vm481, %v464, %v466
        %v499 = vsel %vm481, %v466, %v468
        %v500 = vsel %vm481, %v468, %v470
        %v501 = vsel %vm481, %v470, %v472
        %v502 = vsel %vm481, %v472, %v474
        %v503 = vsel %vm481, %v474, %v476
        %v504 = vsel %vm481, %v476, %v478
        %v505 = vsel %vm481, %v478, %v480
        %vm530 = vcmask 392192
        %v532 = vsel %vm530, %v426, 0
        %534 = vmatpush.bf16.msra.mxu0 0
        %535 = vmatpush.bf16.msra.mxu0 0
        %536 = vmatpush.bf16.msra.mxu0 0
        %537 = vmatpush.bf16.msra.mxu0 0
        %538 = vmatpush.bf16.msra.mxu0 0
        %539 = vmatpush.bf16.msra.mxu0 %v498
        %540 = vmatpush.bf16.msra.mxu0 %v490
        %541 = vmatpush.bf16.msra.mxu0 %v482
        %542 = vmatmul.bf16.gmra.mxu0 %v532
        %v543 = vpop.f32.mrf.mxu0
        %v544 = vadd.f32 %v415, %v543
        %v545 = vpop.f32.mrf.mxu0
        %v546 = vadd.f32 %v420, %v545
        %547 = vdwg.mxu0
        %548 = vmatpush.bf16.msra.mxu0 0
        %549 = vmatpush.bf16.msra.mxu0 0
        %550 = vmatpush.bf16.msra.mxu0 0
        %551 = vmatpush.bf16.msra.mxu0 0
        %552 = vmatpush.bf16.msra.mxu0 0
        %553 = vmatpush.bf16.msra.mxu0 %v499
        %554 = vmatpush.bf16.msra.mxu0 %v491
        %555 = vmatpush.bf16.msra.mxu0 %v483
        %556 = vmatmul.bf16.gmra.mxu0 %v532
        %v557 = vpop.f32.mrf.mxu0
        %v558 = vadd.f32 %v415, %v557
        %v559 = vpop.f32.mrf.mxu0
        %v560 = vadd.f32 %v420, %v559
        %561 = vdwg.mxu0
        %562 = vmatpush.bf16.msra.mxu0 0
        %563 = vmatpush.bf16.msra.mxu0 0
        %564 = vmatpush.bf16.msra.mxu0 0
        %565 = vmatpush.bf16.msra.mxu0 0
        %566 = vmatpush.bf16.msra.mxu0 0
        %567 = vmatpush.bf16.msra.mxu0 %v500
        %568 = vmatpush.bf16.msra.mxu0 %v492
        %569 = vmatpush.bf16.msra.mxu0 %v484
        %570 = vmatmul.bf16.gmra.mxu0 %v532
        %v571 = vpop.f32.mrf.mxu0
        %v572 = vadd.f32 %v415, %v571
        %v573 = vpop.f32.mrf.mxu0
        %v574 = vadd.f32 %v420, %v573
        %575 = vdwg.mxu0
        %576 = vmatpush.bf16.msra.mxu0 0
        %577 = vmatpush.bf16.msra.mxu0 0
        %578 = vmatpush.bf16.msra.mxu0 0
        %579 = vmatpush.bf16.msra.mxu0 0
        %580 = vmatpush.bf16.msra.mxu0 0
        %581 = vmatpush.bf16.msra.mxu0 %v501
        %582 = vmatpush.bf16.msra.mxu0 %v493
        %583 = vmatpush.bf16.msra.mxu0 %v485
        %584 = vmatmul.bf16.gmra.mxu0 %v532
        %v585 = vpop.f32.mrf.mxu0
        %v586 = vadd.f32 %v415, %v585
        %v587 = vpop.f32.mrf.mxu0
        %v588 = vadd.f32 %v420, %v587
        %589 = vdwg.mxu0
        %590 = vmatpush.bf16.msra.mxu0 0
        %591 = vmatpush.bf16.msra.mxu0 0
        %592 = vmatpush.bf16.msra.mxu0 0
        %593 = vmatpush.bf16.msra.mxu0 0
        %594 = vmatpush.bf16.msra.mxu0 0
        %595 = vmatpush.bf16.msra.mxu0 %v502
        %596 = vmatpush.bf16.msra.mxu0 %v494
        %597 = vmatpush.bf16.msra.mxu0 %v486
        %598 = vmatmul.bf16.gmra.mxu0 %v532
        %v599 = vpop.f32.mrf.mxu0
        %v600 = vadd.f32 %v415, %v599
        %v601 = vpop.f32.mrf.mxu0
        %v602 = vadd.f32 %v420, %v601
        %603 = vdwg.mxu0
        %604 = vmatpush.bf16.msra.mxu0 0
        %605 = vmatpush.bf16.msra.mxu0 0
        %606 = vmatpush.bf16.msra.mxu0 0
        %607 = vmatpush.bf16.msra.mxu0 0
        %608 = vmatpush.bf16.msra.mxu0 0
        %609 = vmatpush.bf16.msra.mxu0 %v503
        %610 = vmatpush.bf16.msra.mxu0 %v495
        %611 = vmatpush.bf16.msra.mxu0 %v487
        %612 = vmatmul.bf16.gmra.mxu0 %v532
        %v613 = vpop.f32.mrf.mxu0
        %v614 = vadd.f32 %v415, %v613
        %v615 = vpop.f32.mrf.mxu0
        %v616 = vadd.f32 %v420, %v615
        %617 = vdwg.mxu0
        %618 = vmatpush.bf16.msra.mxu0 0
        %619 = vmatpush.bf16.msra.mxu0 0
        %620 = vmatpush.bf16.msra.mxu0 0
        %621 = vmatpush.bf16.msra.mxu0 0
        %622 = vmatpush.bf16.msra.mxu0 0
        %623 = vmatpush.bf16.msra.mxu0 %v504
        %624 = vmatpush.bf16.msra.mxu0 %v496
        %625 = vmatpush.bf16.msra.mxu0 %v488
        %626 = vmatmul.bf16.gmra.mxu0 %v532
        %v627 = vpop.f32.mrf.mxu0
        %v628 = vadd.f32 %v415, %v627
        %v629 = vpop.f32.mrf.mxu0
        %v630 = vadd.f32 %v420, %v629
        %631 = vdwg.mxu0
        %632 = vmatpush.bf16.msra.mxu0 0
        %633 = vmatpush.bf16.msra.mxu0 0
        %634 = vmatpush.bf16.msra.mxu0 0
        %635 = vmatpush.bf16.msra.mxu0 0
        %636 = vmatpush.bf16.msra.mxu0 0
        %637 = vmatpush.bf16.msra.mxu0 %v505
        %638 = vmatpush.bf16.msra.mxu0 %v497
        %639 = vmatpush.bf16.msra.mxu0 %v489
        %640 = vmatmul.bf16.gmra.mxu0 %v532
        %v641 = vpop.f32.mrf.mxu0
        %v642 = vadd.f32 %v415, %v641
        %v643 = vpop.f32.mrf.mxu0
        %v644 = vadd.f32 %v420, %v643
        %645 = vdwg.mxu0
        %vm646 = vcmp.gt.f32.partialorder %v544, 0.0
        %vm647 = vcmp.gt.f32.partialorder %v558, 0.0
        %vm648 = vcmp.gt.f32.partialorder %v572, 0.0
        %vm649 = vcmp.gt.f32.partialorder %v586, 0.0
        %vm650 = vcmp.gt.f32.partialorder %v600, 0.0
        %vm651 = vcmp.gt.f32.partialorder %v614, 0.0
        %vm652 = vcmp.gt.f32.partialorder %v628, 0.0
        %vm653 = vcmp.gt.f32.partialorder %v642, 0.0
        %vm654 = vcmp.gt.f32.partialorder %v546, 0.0
        %vm655 = vcmp.gt.f32.partialorder %v560, 0.0
        %vm656 = vcmp.gt.f32.partialorder %v574, 0.0
        %vm657 = vcmp.gt.f32.partialorder %v588, 0.0
        %vm658 = vcmp.gt.f32.partialorder %v602, 0.0
        %vm659 = vcmp.gt.f32.partialorder %v616, 0.0
        %vm660 = vcmp.gt.f32.partialorder %v630, 0.0
        %vm661 = vcmp.gt.f32.partialorder %v644, 0.0
        %v662 = vmin.f32 %v544, 0.0
        %v663 = vmin.f32 %v558, 0.0
        %v664 = vmin.f32 %v572, 0.0
        %v665 = vmin.f32 %v586, 0.0
        %v666 = vmin.f32 %v600, 0.0
        %v667 = vmin.f32 %v614, 0.0
        %v668 = vmin.f32 %v628, 0.0
        %v669 = vmin.f32 %v642, 0.0
        %v670 = vmin.f32 %v546, 0.0
        %v671 = vmin.f32 %v560, 0.0
        %v672 = vmin.f32 %v574, 0.0
        %v673 = vmin.f32 %v588, 0.0
        %v674 = vmin.f32 %v602, 0.0
        %v675 = vmin.f32 %v616, 0.0
        %v676 = vmin.f32 %v630, 0.0
        %v677 = vmin.f32 %v644, 0.0
        %v678 = vmul.f32 %v662, 1.442695
        %v679 = vpow.pop %v678
        %v680 = vmul.f32 %v663, 1.442695
        %v681 = vpow.pop %v680
        %v682 = vmul.f32 %v664, 1.442695
        %v683 = vpow.pop %v682
        %v684 = vmul.f32 %v665, 1.442695
        %v685 = vpow.pop %v684
        %v686 = vmul.f32 %v666, 1.442695
        %v687 = vpow.pop %v686
        %v688 = vmul.f32 %v667, 1.442695
        %v689 = vpow.pop %v688
        %v690 = vmul.f32 %v668, 1.442695
        %v691 = vpow.pop %v690
        %v692 = vmul.f32 %v669, 1.442695
        %v693 = vpow.pop %v692
        %v694 = vmul.f32 %v670, 1.442695
        %v695 = vpow.pop %v694
        %v696 = vmul.f32 %v671, 1.442695
        %v697 = vpow.pop %v696
        %v698 = vmul.f32 %v672, 1.442695
        %v699 = vpow.pop %v698
        %v700 = vmul.f32 %v673, 1.442695
        %v701 = vpow.pop %v700
        %v702 = vmul.f32 %v674, 1.442695
        %v703 = vpow.pop %v702
        %v704 = vmul.f32 %v675, 1.442695
        %v705 = vpow.pop %v704
        %v706 = vmul.f32 %v676, 1.442695
        %v707 = vpow.pop %v706
        %v708 = vmul.f32 %v677, 1.442695
        %v709 = vpow.pop %v708
        %v710 = vsub.f32 %v679, 1.0
        %v711 = vsub.f32 %v681, 1.0
        %v712 = vsub.f32 %v683, 1.0
        %v713 = vsub.f32 %v685, 1.0
        %v714 = vsub.f32 %v687, 1.0
        %v715 = vsub.f32 %v689, 1.0
        %v716 = vsub.f32 %v691, 1.0
        %v717 = vsub.f32 %v693, 1.0
        %v718 = vsub.f32 %v695, 1.0
        %v719 = vsub.f32 %v697, 1.0
        %v720 = vsub.f32 %v699, 1.0
        %v721 = vsub.f32 %v701, 1.0
        %v722 = vsub.f32 %v703, 1.0
        %v723 = vsub.f32 %v705, 1.0
        %v724 = vsub.f32 %v707, 1.0
        %v725 = vsub.f32 %v709, 1.0
        %v726 = vsel %vm646, %v544, %v710
        %v727 = vsel %vm647, %v558, %v711
        %v728 = vsel %vm648, %v572, %v712
        %v729 = vsel %vm649, %v586, %v713
        %v730 = vsel %vm650, %v600, %v714
        %v731 = vsel %vm651, %v614, %v715
        %v732 = vsel %vm652, %v628, %v716
        %v733 = vsel %vm653, %v642, %v717
        %v734 = vsel %vm654, %v546, %v718
        %v735 = vsel %vm655, %v560, %v719
        %v736 = vsel %vm656, %v574, %v720
        %v737 = vsel %vm657, %v588, %v721
        %v738 = vsel %vm658, %v602, %v722
        %v739 = vsel %vm659, %v616, %v723
        %v740 = vsel %vm660, %v630, %v724
        %v741 = vsel %vm661, %v644, %v725
        %v742 = vld [vmem:[%s3] sm:$0xf]
        %v743 = vld [vmem:[%s3 + $0x4] sm:$0xf]
        %v744 = vpack.c.bf16 %v734, %v726
        %v745 = vpack.c.bf16 %v735, %v727
        %v746 = vpack.c.bf16 %v736, %v728
        %v747 = vpack.c.bf16 %v737, %v729
        %v748 = vpack.c.bf16 %v738, %v730
        %v749 = vpack.c.bf16 %v739, %v731
        %v750 = vpack.c.bf16 %v740, %v732
        %v751 = vpack.c.bf16 %v741, %v733
        %v752 = vld [vmem:[%s4] sm:$0xff]
        %v753 = vld [vmem:[%s4 + $0x8] sm:$0xff]
        %755 = vset.pattern.permute.xlu0 0
        %756 = vperm.xlu0 %755, %v752
        %v757 = vpop.permute.xlu0 %756
        %760 = vset.pattern.permute.xlu0 0
        %761 = vperm.xlu0 %760, %v753
        %v762 = vpop.permute.xlu0 %761
        %v766 = vunpack.c.l.b16 %v742
        %v767 = vunpack.c.l.b16 %v743
        %v768 = vpack.c.b16 %v767, %v766
        %vm769 = vcmask 130048
        %v771 = vsel %vm769, %v768, 0
        %773 = vmatpush.bf16.msra.mxu0 0
        %774 = vmatpush.bf16.msra.mxu0 0
        %775 = vmatpush.bf16.msra.mxu0 0
        %776 = vmatpush.bf16.msra.mxu0 0
        %777 = vmatpush.bf16.msra.mxu0 0
        %778 = vmatpush.bf16.msra.mxu0 0
        %779 = vmatpush.bf16.msra.mxu0 0
        %780 = vmatpush.bf16.msra.mxu0 %v744
        %781 = vmatmul.bf16.gmra.mxu0 %v771
        %v782 = vpop.f32.mrf.mxu0
        %v783 = vadd.f32 %v757, %v782
        %v784 = vpop.f32.mrf.mxu0
        %v785 = vadd.f32 %v762, %v784
        %786 = vdwg.mxu0
        %787 = vmatpush.bf16.msra.mxu0 0
        %788 = vmatpush.bf16.msra.mxu0 0
        %789 = vmatpush.bf16.msra.mxu0 0
        %790 = vmatpush.bf16.msra.mxu0 0
        %791 = vmatpush.bf16.msra.mxu0 0
        %792 = vmatpush.bf16.msra.mxu0 0
        %793 = vmatpush.bf16.msra.mxu0 0
        %794 = vmatpush.bf16.msra.mxu0 %v745
        %795 = vmatmul.bf16.gmra.mxu0 %v771
        %v796 = vpop.f32.mrf.mxu0
        %v797 = vadd.f32 %v757, %v796
        %v798 = vpop.f32.mrf.mxu0
        %v799 = vadd.f32 %v762, %v798
        %800 = vdwg.mxu0
        %801 = vmatpush.bf16.msra.mxu0 0
        %802 = vmatpush.bf16.msra.mxu0 0
        %803 = vmatpush.bf16.msra.mxu0 0
        %804 = vmatpush.bf16.msra.mxu0 0
        %805 = vmatpush.bf16.msra.mxu0 0
        %806 = vmatpush.bf16.msra.mxu0 0
        %807 = vmatpush.bf16.msra.mxu0 0
        %808 = vmatpush.bf16.msra.mxu0 %v746
        %809 = vmatmul.bf16.gmra.mxu0 %v771
        %v810 = vpop.f32.mrf.mxu0
        %v811 = vadd.f32 %v757, %v810
        %v812 = vpop.f32.mrf.mxu0
        %v813 = vadd.f32 %v762, %v812
        %814 = vdwg.mxu0
        %815 = vmatpush.bf16.msra.mxu0 0
        %816 = vmatpush.bf16.msra.mxu0 0
        %817 = vmatpush.bf16.msra.mxu0 0
        %818 = vmatpush.bf16.msra.mxu0 0
        %819 = vmatpush.bf16.msra.mxu0 0
        %820 = vmatpush.bf16.msra.mxu0 0
        %821 = vmatpush.bf16.msra.mxu0 0
        %822 = vmatpush.bf16.msra.mxu0 %v747
        %823 = vmatmul.bf16.gmra.mxu0 %v771
        %v824 = vpop.f32.mrf.mxu0
        %v825 = vadd.f32 %v757, %v824
        %v826 = vpop.f32.mrf.mxu0
        %v827 = vadd.f32 %v762, %v826
        %828 = vdwg.mxu0
        %829 = vmatpush.bf16.msra.mxu0 0
        %830 = vmatpush.bf16.msra.mxu0 0
        %831 = vmatpush.bf16.msra.mxu0 0
        %832 = vmatpush.bf16.msra.mxu0 0
        %833 = vmatpush.bf16.msra.mxu0 0
        %834 = vmatpush.bf16.msra.mxu0 0
        %835 = vmatpush.bf16.msra.mxu0 0
        %836 = vmatpush.bf16.msra.mxu0 %v748
        %837 = vmatmul.bf16.gmra.mxu0 %v771
        %v838 = vpop.f32.mrf.mxu0
        %v839 = vadd.f32 %v757, %v838
        %v840 = vpop.f32.mrf.mxu0
        %v841 = vadd.f32 %v762, %v840
        %842 = vdwg.mxu0
        %843 = vmatpush.bf16.msra.mxu0 0
        %844 = vmatpush.bf16.msra.mxu0 0
        %845 = vmatpush.bf16.msra.mxu0 0
        %846 = vmatpush.bf16.msra.mxu0 0
        %847 = vmatpush.bf16.msra.mxu0 0
        %848 = vmatpush.bf16.msra.mxu0 0
        %849 = vmatpush.bf16.msra.mxu0 0
        %850 = vmatpush.bf16.msra.mxu0 %v749
        %851 = vmatmul.bf16.gmra.mxu0 %v771
        %v852 = vpop.f32.mrf.mxu0
        %v853 = vadd.f32 %v757, %v852
        %v854 = vpop.f32.mrf.mxu0
        %v855 = vadd.f32 %v762, %v854
        %856 = vdwg.mxu0
        %857 = vmatpush.bf16.msra.mxu0 0
        %858 = vmatpush.bf16.msra.mxu0 0
        %859 = vmatpush.bf16.msra.mxu0 0
        %860 = vmatpush.bf16.msra.mxu0 0
        %861 = vmatpush.bf16.msra.mxu0 0
        %862 = vmatpush.bf16.msra.mxu0 0
        %863 = vmatpush.bf16.msra.mxu0 0
        %864 = vmatpush.bf16.msra.mxu0 %v750
        %865 = vmatmul.bf16.gmra.mxu0 %v771
        %v866 = vpop.f32.mrf.mxu0
        %v867 = vadd.f32 %v757, %v866
        %v868 = vpop.f32.mrf.mxu0
        %v869 = vadd.f32 %v762, %v868
        %870 = vdwg.mxu0
        %871 = vmatpush.bf16.msra.mxu0 0
        %872 = vmatpush.bf16.msra.mxu0 0
        %873 = vmatpush.bf16.msra.mxu0 0
        %874 = vmatpush.bf16.msra.mxu0 0
        %875 = vmatpush.bf16.msra.mxu0 0
        %876 = vmatpush.bf16.msra.mxu0 0
        %877 = vmatpush.bf16.msra.mxu0 0
        %878 = vmatpush.bf16.msra.mxu0 %v751
        %879 = vmatmul.bf16.gmra.mxu0 %v771
        %v880 = vpop.f32.mrf.mxu0
        %v881 = vadd.f32 %v757, %v880
        %v882 = vpop.f32.mrf.mxu0
        %v883 = vadd.f32 %v762, %v882
        %884 = vdwg.mxu0
        %vm885 = vcmp.gt.f32.partialorder %v783, 0.0
        %vm886 = vcmp.gt.f32.partialorder %v797, 0.0
        %vm887 = vcmp.gt.f32.partialorder %v811, 0.0
        %vm888 = vcmp.gt.f32.partialorder %v825, 0.0
        %vm889 = vcmp.gt.f32.partialorder %v839, 0.0
        %vm890 = vcmp.gt.f32.partialorder %v853, 0.0
        %vm891 = vcmp.gt.f32.partialorder %v867, 0.0
        %vm892 = vcmp.gt.f32.partialorder %v881, 0.0
        %vm893 = vcmp.gt.f32.partialorder %v785, 0.0
        %vm894 = vcmp.gt.f32.partialorder %v799, 0.0
        %vm895 = vcmp.gt.f32.partialorder %v813, 0.0
        %vm896 = vcmp.gt.f32.partialorder %v827, 0.0
        %vm897 = vcmp.gt.f32.partialorder %v841, 0.0
        %vm898 = vcmp.gt.f32.partialorder %v855, 0.0
        %vm899 = vcmp.gt.f32.partialorder %v869, 0.0
        %vm900 = vcmp.gt.f32.partialorder %v883, 0.0
        %v901 = vmin.f32 %v783, 0.0
        %v902 = vmin.f32 %v797, 0.0
        %v903 = vmin.f32 %v811, 0.0
        %v904 = vmin.f32 %v825, 0.0
        %v905 = vmin.f32 %v839, 0.0
        %v906 = vmin.f32 %v853, 0.0
        %v907 = vmin.f32 %v867, 0.0
        %v908 = vmin.f32 %v881, 0.0
        %v909 = vmin.f32 %v785, 0.0
        %v910 = vmin.f32 %v799, 0.0
        %v911 = vmin.f32 %v813, 0.0
        %v912 = vmin.f32 %v827, 0.0
        %v913 = vmin.f32 %v841, 0.0
        %v914 = vmin.f32 %v855, 0.0
        %v915 = vmin.f32 %v869, 0.0
        %v916 = vmin.f32 %v883, 0.0
        %v917 = vmul.f32 %v901, 1.442695
        %v918 = vpow.pop %v917
        %v919 = vmul.f32 %v902, 1.442695
        %v920 = vpow.pop %v919
        %v921 = vmul.f32 %v903, 1.442695
        %v922 = vpow.pop %v921
        %v923 = vmul.f32 %v904, 1.442695
        %v924 = vpow.pop %v923
        %v925 = vmul.f32 %v905, 1.442695
        %v926 = vpow.pop %v925
        %v927 = vmul.f32 %v906, 1.442695
        %v928 = vpow.pop %v927
        %v929 = vmul.f32 %v907, 1.442695
        %v930 = vpow.pop %v929
        %v931 = vmul.f32 %v908, 1.442695
        %v932 = vpow.pop %v931
        %v933 = vmul.f32 %v909, 1.442695
        %v934 = vpow.pop %v933
        %v935 = vmul.f32 %v910, 1.442695
        %v936 = vpow.pop %v935
        %v937 = vmul.f32 %v911, 1.442695
        %v938 = vpow.pop %v937
        %v939 = vmul.f32 %v912, 1.442695
        %v940 = vpow.pop %v939
        %v941 = vmul.f32 %v913, 1.442695
        %v942 = vpow.pop %v941
        %v943 = vmul.f32 %v914, 1.442695
        %v944 = vpow.pop %v943
        %v945 = vmul.f32 %v915, 1.442695
        %v946 = vpow.pop %v945
        %v947 = vmul.f32 %v916, 1.442695
        %v948 = vpow.pop %v947
        %v949 = vsub.f32 %v918, 1.0
        %v950 = vsub.f32 %v920, 1.0
        %v951 = vsub.f32 %v922, 1.0
        %v952 = vsub.f32 %v924, 1.0
        %v953 = vsub.f32 %v926, 1.0
        %v954 = vsub.f32 %v928, 1.0
        %v955 = vsub.f32 %v930, 1.0
        %v956 = vsub.f32 %v932, 1.0
        %v957 = vsub.f32 %v934, 1.0
        %v958 = vsub.f32 %v936, 1.0
        %v959 = vsub.f32 %v938, 1.0
        %v960 = vsub.f32 %v940, 1.0
        %v961 = vsub.f32 %v942, 1.0
        %v962 = vsub.f32 %v944, 1.0
        %v963 = vsub.f32 %v946, 1.0
        %v964 = vsub.f32 %v948, 1.0
        %v965 = vsel %vm885, %v783, %v949
        %v966 = vsel %vm886, %v797, %v950
        %v967 = vsel %vm887, %v811, %v951
        %v968 = vsel %vm888, %v825, %v952
        %v969 = vsel %vm889, %v839, %v953
        %v970 = vsel %vm890, %v853, %v954
        %v971 = vsel %vm891, %v867, %v955
        %v972 = vsel %vm892, %v881, %v956
        %v973 = vsel %vm893, %v785, %v957
        %v974 = vsel %vm894, %v799, %v958
        %v975 = vsel %vm895, %v813, %v959
        %v976 = vsel %vm896, %v827, %v960
        %v977 = vsel %vm897, %v841, %v961
        %v978 = vsel %vm898, %v855, %v962
        %v979 = vsel %vm899, %v869, %v963
        %v980 = vsel %vm900, %v883, %v964
        %v981 = vld [vmem:[%s5] sm:$0xf]
        %v982 = vld [vmem:[%s5 + $0x4] sm:$0xf]
        %v983 = vld [vmem:[%s6] sm:$0xff]
        %v984 = vld [vmem:[%s6 + $0x8] sm:$0xff]
        %986 = vset.pattern.permute.xlu0 0
        %987 = vperm.xlu0 %986, %v983
        %v988 = vpop.permute.xlu0 %987
        %991 = vset.pattern.permute.xlu0 0
        %992 = vperm.xlu0 %991, %v984
        %v993 = vpop.permute.xlu0 %992
        %v997 = vunpack.c.l.b16 %v981
        %v998 = vunpack.c.l.b16 %v982
        %v999 = vpack.c.b16 %v998, %v997
        %v1009 = vsel %vm769, %v999, 0
        %1011 = vmatpush.bf16.msra.mxu0 0
        %1012 = vmatpush.bf16.msra.mxu0 0
        %1013 = vmatpush.bf16.msra.mxu0 0
        %1014 = vmatpush.bf16.msra.mxu0 0
        %1015 = vmatpush.bf16.msra.mxu0 0
        %1016 = vmatpush.bf16.msra.mxu0 0
        %1017 = vmatpush.bf16.msra.mxu0 0
        %1018 = vmatpush.bf16.msra.mxu0 %v348
        %1019 = vmatmul.bf16.gmra.mxu0 %v1009
        %v1020 = vpop.f32.mrf.mxu0
        %v1021 = vadd.f32 %v988, %v1020
        %v1022 = vpop.f32.mrf.mxu0
        %v1023 = vadd.f32 %v993, %v1022
        %1024 = vdwg.mxu0
        %1025 = vmatpush.bf16.msra.mxu0 0
        %1026 = vmatpush.bf16.msra.mxu0 0
        %1027 = vmatpush.bf16.msra.mxu0 0
        %1028 = vmatpush.bf16.msra.mxu0 0
        %1029 = vmatpush.bf16.msra.mxu0 0
        %1030 = vmatpush.bf16.msra.mxu0 0
        %1031 = vmatpush.bf16.msra.mxu0 0
        %1032 = vmatpush.bf16.msra.mxu0 %v349
        %1033 = vmatmul.bf16.gmra.mxu0 %v1009
        %v1034 = vpop.f32.mrf.mxu0
        %v1035 = vadd.f32 %v988, %v1034
        %v1036 = vpop.f32.mrf.mxu0
        %v1037 = vadd.f32 %v993, %v1036
        %1038 = vdwg.mxu0
        %1039 = vmatpush.bf16.msra.mxu0 0
        %1040 = vmatpush.bf16.msra.mxu0 0
        %1041 = vmatpush.bf16.msra.mxu0 0
        %1042 = vmatpush.bf16.msra.mxu0 0
        %1043 = vmatpush.bf16.msra.mxu0 0
        %1044 = vmatpush.bf16.msra.mxu0 0
        %1045 = vmatpush.bf16.msra.mxu0 0
        %1046 = vmatpush.bf16.msra.mxu0 %v350
        %1047 = vmatmul.bf16.gmra.mxu0 %v1009
        %v1048 = vpop.f32.mrf.mxu0
        %v1049 = vadd.f32 %v988, %v1048
        %v1050 = vpop.f32.mrf.mxu0
        %v1051 = vadd.f32 %v993, %v1050
        %1052 = vdwg.mxu0
        %1053 = vmatpush.bf16.msra.mxu0 0
        %1054 = vmatpush.bf16.msra.mxu0 0
        %1055 = vmatpush.bf16.msra.mxu0 0
        %1056 = vmatpush.bf16.msra.mxu0 0
        %1057 = vmatpush.bf16.msra.mxu0 0
        %1058 = vmatpush.bf16.msra.mxu0 0
        %1059 = vmatpush.bf16.msra.mxu0 0
        %1060 = vmatpush.bf16.msra.mxu0 %v351
        %1061 = vmatmul.bf16.gmra.mxu0 %v1009
        %v1062 = vpop.f32.mrf.mxu0
        %v1063 = vadd.f32 %v988, %v1062
        %v1064 = vpop.f32.mrf.mxu0
        %v1065 = vadd.f32 %v993, %v1064
        %1066 = vdwg.mxu0
        %1067 = vmatpush.bf16.msra.mxu0 0
        %1068 = vmatpush.bf16.msra.mxu0 0
        %1069 = vmatpush.bf16.msra.mxu0 0
        %1070 = vmatpush.bf16.msra.mxu0 0
        %1071 = vmatpush.bf16.msra.mxu0 0
        %1072 = vmatpush.bf16.msra.mxu0 0
        %1073 = vmatpush.bf16.msra.mxu0 0
        %1074 = vmatpush.bf16.msra.mxu0 %v352
        %1075 = vmatmul.bf16.gmra.mxu0 %v1009
        %v1076 = vpop.f32.mrf.mxu0
        %v1077 = vadd.f32 %v988, %v1076
        %v1078 = vpop.f32.mrf.mxu0
        %v1079 = vadd.f32 %v993, %v1078
        %1080 = vdwg.mxu0
        %1081 = vmatpush.bf16.msra.mxu0 0
        %1082 = vmatpush.bf16.msra.mxu0 0
        %1083 = vmatpush.bf16.msra.mxu0 0
        %1084 = vmatpush.bf16.msra.mxu0 0
        %1085 = vmatpush.bf16.msra.mxu0 0
        %1086 = vmatpush.bf16.msra.mxu0 0
        %1087 = vmatpush.bf16.msra.mxu0 0
        %1088 = vmatpush.bf16.msra.mxu0 %v353
        %1089 = vmatmul.bf16.gmra.mxu0 %v1009
        %v1090 = vpop.f32.mrf.mxu0
        %v1091 = vadd.f32 %v988, %v1090
        %v1092 = vpop.f32.mrf.mxu0
        %v1093 = vadd.f32 %v993, %v1092
        %1094 = vdwg.mxu0
        %1095 = vmatpush.bf16.msra.mxu0 0
        %1096 = vmatpush.bf16.msra.mxu0 0
        %1097 = vmatpush.bf16.msra.mxu0 0
        %1098 = vmatpush.bf16.msra.mxu0 0
        %1099 = vmatpush.bf16.msra.mxu0 0
        %1100 = vmatpush.bf16.msra.mxu0 0
        %1101 = vmatpush.bf16.msra.mxu0 0
        %1102 = vmatpush.bf16.msra.mxu0 %v354
        %1103 = vmatmul.bf16.gmra.mxu0 %v1009
        %v1104 = vpop.f32.mrf.mxu0
        %v1105 = vadd.f32 %v988, %v1104
        %v1106 = vpop.f32.mrf.mxu0
        %v1107 = vadd.f32 %v993, %v1106
        %1108 = vdwg.mxu0
        %1109 = vmatpush.bf16.msra.mxu0 0
        %1110 = vmatpush.bf16.msra.mxu0 0
        %1111 = vmatpush.bf16.msra.mxu0 0
        %1112 = vmatpush.bf16.msra.mxu0 0
        %1113 = vmatpush.bf16.msra.mxu0 0
        %1114 = vmatpush.bf16.msra.mxu0 0
        %1115 = vmatpush.bf16.msra.mxu0 0
        %1116 = vmatpush.bf16.msra.mxu0 %v355
        %1117 = vmatmul.bf16.gmra.mxu0 %v1009
        %v1118 = vpop.f32.mrf.mxu0
        %v1119 = vadd.f32 %v988, %v1118
        %v1120 = vpop.f32.mrf.mxu0
        %v1121 = vadd.f32 %v993, %v1120
        %1122 = vdwg.mxu0
        %vm1123 = vcmp.gt.f32.partialorder %v1021, 0.0
        %vm1124 = vcmp.gt.f32.partialorder %v1035, 0.0
        %vm1125 = vcmp.gt.f32.partialorder %v1049, 0.0
        %vm1126 = vcmp.gt.f32.partialorder %v1063, 0.0
        %vm1127 = vcmp.gt.f32.partialorder %v1077, 0.0
        %vm1128 = vcmp.gt.f32.partialorder %v1091, 0.0
        %vm1129 = vcmp.gt.f32.partialorder %v1105, 0.0
        %vm1130 = vcmp.gt.f32.partialorder %v1119, 0.0
        %vm1131 = vcmp.gt.f32.partialorder %v1023, 0.0
        %vm1132 = vcmp.gt.f32.partialorder %v1037, 0.0
        %vm1133 = vcmp.gt.f32.partialorder %v1051, 0.0
        %vm1134 = vcmp.gt.f32.partialorder %v1065, 0.0
        %vm1135 = vcmp.gt.f32.partialorder %v1079, 0.0
        %vm1136 = vcmp.gt.f32.partialorder %v1093, 0.0
        %vm1137 = vcmp.gt.f32.partialorder %v1107, 0.0
        %vm1138 = vcmp.gt.f32.partialorder %v1121, 0.0
        %v1139 = vmin.f32 %v1021, 0.0
        %v1140 = vmin.f32 %v1035, 0.0
        %v1141 = vmin.f32 %v1049, 0.0
        %v1142 = vmin.f32 %v1063, 0.0
        %v1143 = vmin.f32 %v1077, 0.0
        %v1144 = vmin.f32 %v1091, 0.0
        %v1145 = vmin.f32 %v1105, 0.0
        %v1146 = vmin.f32 %v1119, 0.0
        %v1147 = vmin.f32 %v1023, 0.0
        %v1148 = vmin.f32 %v1037, 0.0
        %v1149 = vmin.f32 %v1051, 0.0
        %v1150 = vmin.f32 %v1065, 0.0
        %v1151 = vmin.f32 %v1079, 0.0
        %v1152 = vmin.f32 %v1093, 0.0
        %v1153 = vmin.f32 %v1107, 0.0
        %v1154 = vmin.f32 %v1121, 0.0
        %v1155 = vmul.f32 %v1139, 1.442695
        %v1156 = vpow.pop %v1155
        %v1157 = vmul.f32 %v1140, 1.442695
        %v1158 = vpow.pop %v1157
        %v1159 = vmul.f32 %v1141, 1.442695
        %v1160 = vpow.pop %v1159
        %v1161 = vmul.f32 %v1142, 1.442695
        %v1162 = vpow.pop %v1161
        %v1163 = vmul.f32 %v1143, 1.442695
        %v1164 = vpow.pop %v1163
        %v1165 = vmul.f32 %v1144, 1.442695
        %v1166 = vpow.pop %v1165
        %v1167 = vmul.f32 %v1145, 1.442695
        %v1168 = vpow.pop %v1167
        %v1169 = vmul.f32 %v1146, 1.442695
        %v1170 = vpow.pop %v1169
        %v1171 = vmul.f32 %v1147, 1.442695
        %v1172 = vpow.pop %v1171
        %v1173 = vmul.f32 %v1148, 1.442695
        %v1174 = vpow.pop %v1173
        %v1175 = vmul.f32 %v1149, 1.442695
        %v1176 = vpow.pop %v1175
        %v1177 = vmul.f32 %v1150, 1.442695
        %v1178 = vpow.pop %v1177
        %v1179 = vmul.f32 %v1151, 1.442695
        %v1180 = vpow.pop %v1179
        %v1181 = vmul.f32 %v1152, 1.442695
        %v1182 = vpow.pop %v1181
        %v1183 = vmul.f32 %v1153, 1.442695
        %v1184 = vpow.pop %v1183
        %v1185 = vmul.f32 %v1154, 1.442695
        %v1186 = vpow.pop %v1185
        %v1187 = vsub.f32 %v1156, 1.0
        %v1188 = vsub.f32 %v1158, 1.0
        %v1189 = vsub.f32 %v1160, 1.0
        %v1190 = vsub.f32 %v1162, 1.0
        %v1191 = vsub.f32 %v1164, 1.0
        %v1192 = vsub.f32 %v1166, 1.0
        %v1193 = vsub.f32 %v1168, 1.0
        %v1194 = vsub.f32 %v1170, 1.0
        %v1195 = vsub.f32 %v1172, 1.0
        %v1196 = vsub.f32 %v1174, 1.0
        %v1197 = vsub.f32 %v1176, 1.0
        %v1198 = vsub.f32 %v1178, 1.0
        %v1199 = vsub.f32 %v1180, 1.0
        %v1200 = vsub.f32 %v1182, 1.0
        %v1201 = vsub.f32 %v1184, 1.0
        %v1202 = vsub.f32 %v1186, 1.0
        %v1203 = vsel %vm1123, %v1021, %v1187
        %v1204 = vsel %vm1124, %v1035, %v1188
        %v1205 = vsel %vm1125, %v1049, %v1189
        %v1206 = vsel %vm1126, %v1063, %v1190
        %v1207 = vsel %vm1127, %v1077, %v1191
        %v1208 = vsel %vm1128, %v1091, %v1192
        %v1209 = vsel %vm1129, %v1105, %v1193
        %v1210 = vsel %vm1130, %v1119, %v1194
        %v1211 = vsel %vm1131, %v1023, %v1195
        %v1212 = vsel %vm1132, %v1037, %v1196
        %v1213 = vsel %vm1133, %v1051, %v1197
        %v1214 = vsel %vm1134, %v1065, %v1198
        %v1215 = vsel %vm1135, %v1079, %v1199
        %v1216 = vsel %vm1136, %v1093, %v1200
        %v1217 = vsel %vm1137, %v1107, %v1201
        %v1218 = vsel %vm1138, %v1121, %v1202
        %v1219 = vadd.f32 %v1203, %v965
        %v1220 = vadd.f32 %v1204, %v966
        %v1221 = vadd.f32 %v1205, %v967
        %v1222 = vadd.f32 %v1206, %v968
        %v1223 = vadd.f32 %v1207, %v969
        %v1224 = vadd.f32 %v1208, %v970
        %v1225 = vadd.f32 %v1209, %v971
        %v1226 = vadd.f32 %v1210, %v972
        %v1227 = vadd.f32 %v1211, %v973
        %v1228 = vadd.f32 %v1212, %v974
        %v1229 = vadd.f32 %v1213, %v975
        %v1230 = vadd.f32 %v1214, %v976
        %v1231 = vadd.f32 %v1215, %v977
        %v1232 = vadd.f32 %v1216, %v978
        %v1233 = vadd.f32 %v1217, %v979
        %v1234 = vadd.f32 %v1218, %v980
        %1235 = vst [vmem:[%s298] sm:$0xff] %v1219
        %1236 = vst [vmem:[%s298 + $0x8] sm:$0xff] %v1220
        %1237 = vst [vmem:[%s298 + $0x10] sm:$0xff] %v1221
        %1238 = vst [vmem:[%s298 + $0x18] sm:$0xff] %v1222
        %1239 = vst [vmem:[%s298 + $0x20] sm:$0xff] %v1223
        %1240 = vst [vmem:[%s298 + $0x28] sm:$0xff] %v1224
        %1241 = vst [vmem:[%s298 + $0x30] sm:$0xff] %v1225
        %1242 = vst [vmem:[%s298 + $0x38] sm:$0xff] %v1226
        %1243 = vst [vmem:[%s298 + $0x40] sm:$0xff] %v1227
        %1244 = vst [vmem:[%s298 + $0x48] sm:$0xff] %v1228
        %1245 = vst [vmem:[%s298 + $0x50] sm:$0xff] %v1229
        %1246 = vst [vmem:[%s298 + $0x58] sm:$0xff] %v1230
        %1247 = vst [vmem:[%s298 + $0x60] sm:$0xff] %v1231
        %1248 = vst [vmem:[%s298 + $0x68] sm:$0xff] %v1232
        %1249 = vst [vmem:[%s298 + $0x70] sm:$0xff] %v1233
        %1250 = vst [vmem:[%s298 + $0x78] sm:$0xff] %v1234
        %s1251 = sand.u32 %s184, 1
        %s1252 = scalar_lea.sflag [#allocation4], %s1251
        %s1253 = sand.u32 %s184, 1
        %s1254 = smul.addr %s1253, 128
        %s1255 = scalar_lea.vmem [#allocation5], %s1254
        // Predicated region
        $region53: #{tpu_custom_call.1} parent=47 // pred_check
          %p1256 = pneg %p194
        $region54: #{tpu_custom_call.1} parent=47 // pred_check_branch
          %1258 = sbr.rel (%p1256) target = $region56
        $region55: #{tpu_custom_call.1} parent=47 // pred_region
          %1260 = vsyncadd %s1252, 0
          %s1261 = smul.addr %s24, 16
          %s1262 = smul.addr %s1261, 8
          %s1263 = scalar_lea.hbm %s7, %s1262
          %s1264 = sshll.u32 %s1255, 4
          %s1265 = int_to_ptr.vmem [resolvable:$true] %s1264
          %s1266 = sshll.u32 %s1263, 4
          %s1267 = int_to_ptr.hbm [resolvable:$true] %s1266
          %1272 = dma.vmem_to_hbm [thread:$0]  %s1265, 2048, %s1267, %s1252, 1024, 1024, 64
        $region56: #{tpu_custom_call.1} parent=47 // pred_fallthru
          _
      $region48: #{tpu_custom_call.1} parent=5 // pred_fallthru
        _
      %p1273 = scmp.le.s32.totalorder 2, %s19
      // Predicated region
      $region57: #{tpu_custom_call.1} parent=5 // pred_check
        %p1274 = pneg %p1273
      $region58: #{tpu_custom_call.1} parent=5 // pred_check_branch
        %1276 = sbr.rel (%p1274) target = $region60
      $region59: #{tpu_custom_call.1} parent=5 // pred_region
        %s1277 = ssub.s32 %s19, 2
        // Predicated region
        $region61: #{tpu_custom_call.1} parent=59 // pred_check
          %p1278 = pneg %p200
        $region62: #{tpu_custom_call.1} parent=59 // pred_check_branch
          %1280 = sbr.rel (%p1278) target = $region64
        $region63: #{tpu_custom_call.1} parent=59 // pred_region
          %s1281 = sand.u32 %s185, 1
          %s1282 = scalar_lea.sflag [#allocation4], %s1281
          %s1283 = sand.u32 %s185, 1
          %s1284 = smul.addr %s1283, 128
          %s1285 = scalar_lea.vmem [#allocation5], %s1284
          %1287 = dma.done %s1282, 2048
        $region64: #{tpu_custom_call.1} parent=59 // pred_fallthru
          _
      $region60: #{tpu_custom_call.1} parent=5 // pred_fallthru
        _
    $region6: #{tpu_custom_call.1} parent=1 // loop_footer
      %s23 = sadd.s32 1, %s19
    $region7: #{tpu_custom_call.1} parent=1 // loop_footer_branch
      %18 = sbr.rel target = $region3
    $region8: #{tpu_custom_call.1} parent=1 // loop_exit
      _
    %1288 = vsyncpa [#allocation3], 1
    %s1289 = scalar_lea.sflag [#allocation3], 1
    %1290 = vsyncpa %s1289, 1
    %1291 = vsyncpa [#allocation4], 1
    %s1292 = scalar_lea.sflag [#allocation4], 1
    %1293 = vsyncpa %s1292, 1

</llo_original>
